<compile_context>
chip_gen: v7x
topology: tpu7x:2x2x1
jax: 0.10.0
libtpu: 0.0.40
codegen_flags: <defaults>
</compile_context>

<pallas_src>
import functools

import numpy as np
import jax
import jax.numpy as jnp
from jax.experimental import pallas as pl
from jax.experimental.pallas import tpu as pltpu

NUM_DIMS = 2  # module default


# ----------------------------------------------------------------------------
# Pallas kernel: block-diagonal rotation, batch axis on lanes (lane-dense)
# ----------------------------------------------------------------------------
def globalizer_kernel(x_ref, r_ref, o_ref, *, num_dims):
    """x_ref: [F, Mt] features, r_ref: [D*D, Mt] row-major R, o_ref: [F, Mt].

    out[j*D + i, :] = sum_k r[i*D + k, :] * x[j*D + k, :]

    Rows (feature components) are on the sublane axis; the folded batch axis Mt
    is on the lane axis, so each slice below is a full-lane-width [1, Mt] slab.
    All slices are static and the loops are tiny compile-time unrolls.
    """
    D = num_dims
    F = x_ref.shape[0]
    for j in range(F // D):
        for i in range(D):
            acc = (r_ref[i * D : i * D + 1, :]
                   * x_ref[j * D : j * D + 1, :])
            for k in range(1, D):
                acc = acc + (r_ref[i * D + k : i * D + k + 1, :]
                             * x_ref[j * D + k : j * D + k + 1, :])
            o_ref[j * D + i : j * D + i + 1, :] = acc


# ----------------------------------------------------------------------------
# Wrapper: fold leading dims into a lane axis, pick grid=() vs. lane-tiled grid
# ----------------------------------------------------------------------------
def globalize_pallas(x, R, num_dims=NUM_DIMS, lane_block=2048):
    """Pallas Globalizer.forward(x, R).

    x: [..., F] with F a multiple of num_dims.
    R: [..., num_dims, num_dims] rotation per leading-dim element.
    """
    D = num_dims
    F = x.shape[-1]
    assert F % D == 0, "feature dim must be a multiple of num_dims"
    lead = x.shape[:-1]
    M = int(np.prod(lead)) if lead else 1

    # Transposed (lane-dense) layout: big folded-batch axis M on lanes.
    xT = jnp.reshape(x, (M, F)).astype(jnp.float32).T          # [F, M]
    rT = jnp.reshape(R, (M, D * D)).astype(jnp.float32).T      # [D*D, M], lane m, row i*D+k

    kernel = functools.partial(globalizer_kernel, num_dims=D)

    if M > lane_block:
        # Large batch: tile the lane axis; parallel axis feeds both TCs on v7x.
        Mp = pl.cdiv(M, lane_block) * lane_block
        if Mp != M:
            xT = jnp.pad(xT, ((0, 0), (0, Mp - M)))
            rT = jnp.pad(rT, ((0, 0), (0, Mp - M)))
        out_T = pl.pallas_call(
            kernel,
            grid=(Mp // lane_block,),
            in_specs=[
                pl.BlockSpec((F, lane_block), lambda i: (0, i)),
                pl.BlockSpec((D * D, lane_block), lambda i: (0, i)),
            ],
            out_specs=pl.BlockSpec((F, lane_block), lambda i: (0, i)),
            out_shape=jax.ShapeDtypeStruct((F, Mp), jnp.float32),
            compiler_params=pltpu.CompilerParams(
                dimension_semantics=("parallel",)),
        )(xT, rT)
        out_T = out_T[:, :M]
    else:
        # Small batch: no grid, whole arrays in VMEM, single kernel invocation.
        out_T = pl.pallas_call(
            kernel,
            out_shape=jax.ShapeDtypeStruct((F, M), jnp.float32),
        )(xT, rT)

    return jnp.reshape(out_T.T, lead + (F,)).astype(x.dtype)


# ----------------------------------------------------------------------------
# Pure-JAX reference (matches the PyTorch module exactly)
# ----------------------------------------------------------------------------
def globalize_reference(x, R, num_dims=NUM_DIMS):
    chunks = [jnp.einsum('...ij,...j->...i', R, x[..., k:k + num_dims])
              for k in range(0, x.shape[-1], num_dims)]
    return jnp.concatenate(chunks, -1)


def velocity_to_rotation_matrix(vel):
    theta = jnp.arctan2(vel[..., 1], vel[..., 0])
    c, s = jnp.cos(theta), jnp.sin(theta)
    row0 = jnp.stack([c, -s], -1)
    row1 = jnp.stack([s, c], -1)
    return jnp.stack([row0, row1], -2)  # [..., 2, 2]


if __name__ == "__main__":
    key = jax.random.PRNGKey(0)
    k_x, k_v, k_x2, k_v2 = jax.random.split(key, 4)

    # --- small case (batch=2, entities=8, features=4): grid=() path ---------
    B, N, F = 2, 8, 2 * NUM_DIMS
    x = jax.random.normal(k_x, (B, N, F), jnp.float32)
    vel = jax.random.normal(k_v, (B, N, NUM_DIMS), jnp.float32)
    R = velocity_to_rotation_matrix(vel)

    out = globalize_pallas(x, R)
    jax.block_until_ready(out)
    ref = globalize_reference(x, R)
    np.testing.assert_allclose(np.asarray(out), np.asarray(ref),
                               rtol=1e-5, atol=1e-5)
    assert out.shape == (B, N, F)

    # --- larger case (batch=100, features=8): lane-tiled grid + padding -----
    B2, N2, F2 = 100, 8, 4 * NUM_DIMS          # M = 800 -> padded to 1024, grid=(4,)
    x2 = jax.random.normal(k_x2, (B2, N2, F2), jnp.float32)
    vel2 = jax.random.normal(k_v2, (B2, N2, NUM_DIMS), jnp.float32)
    R2 = velocity_to_rotation_matrix(vel2)

    out2 = globalize_pallas(x2, R2, lane_block=256)
    jax.block_until_ready(out2)
    ref2 = globalize_reference(x2, R2)
    np.testing.assert_allclose(np.asarray(out2), np.asarray(ref2),
                               rtol=1e-5, atol=1e-5)

    print("KERNEL_OK")
</pallas_src>

<mosaic_0001>
module attributes {stable_mosaic.version = 11 : i64} {
  func.func @globalizer_kernel(%arg0: memref<4x16xf32, #tpu.memory_space<vmem>>, %arg1: memref<4x16xf32, #tpu.memory_space<vmem>>, %arg2: memref<4x16xf32, #tpu.memory_space<vmem>>) attributes {dimension_semantics = [], scalar_prefetch = 0 : i64, scratch_operands = 0 : i64, tpu.core_type = #tpu.core_type<tc>} {
    %c0 = arith.constant 0 : index
    %c0_0 = arith.constant 0 : index
    %0 = vector.load %arg1[%c0, %c0_0] : memref<4x16xf32, #tpu.memory_space<vmem>>, vector<1x16xf32>
    %c0_1 = arith.constant 0 : index
    %c0_2 = arith.constant 0 : index
    %1 = vector.load %arg0[%c0_1, %c0_2] : memref<4x16xf32, #tpu.memory_space<vmem>>, vector<1x16xf32>
    %2 = arith.mulf %0, %1 : vector<1x16xf32>
    %c1 = arith.constant 1 : index
    %c0_3 = arith.constant 0 : index
    %3 = vector.load %arg1[%c1, %c0_3] : memref<4x16xf32, #tpu.memory_space<vmem>>, vector<1x16xf32>
    %c1_4 = arith.constant 1 : index
    %c0_5 = arith.constant 0 : index
    %4 = vector.load %arg0[%c1_4, %c0_5] : memref<4x16xf32, #tpu.memory_space<vmem>>, vector<1x16xf32>
    %5 = arith.mulf %3, %4 : vector<1x16xf32>
    %6 = arith.addf %2, %5 : vector<1x16xf32>
    %c0_6 = arith.constant 0 : index
    %c0_7 = arith.constant 0 : index
    %7 = vector.load %arg2[%c0_6, %c0_7] : memref<4x16xf32, #tpu.memory_space<vmem>>, vector<1x16xf32>
    tpu.vector_store %arg2[%c0_6, %c0_7], %6 {strides = array<i32>} : memref<4x16xf32, #tpu.memory_space<vmem>>, vector<1x16xf32>,
    %c2 = arith.constant 2 : index
    %c0_8 = arith.constant 0 : index
    %8 = vector.load %arg1[%c2, %c0_8] : memref<4x16xf32, #tpu.memory_space<vmem>>, vector<1x16xf32>
    %c0_9 = arith.constant 0 : index
    %c0_10 = arith.constant 0 : index
    %9 = vector.load %arg0[%c0_9, %c0_10] : memref<4x16xf32, #tpu.memory_space<vmem>>, vector<1x16xf32>
    %10 = arith.mulf %8, %9 : vector<1x16xf32>
    %c3 = arith.constant 3 : index
    %c0_11 = arith.constant 0 : index
    %11 = vector.load %arg1[%c3, %c0_11] : memref<4x16xf32, #tpu.memory_space<vmem>>, vector<1x16xf32>
    %c1_12 = arith.constant 1 : index
    %c0_13 = arith.constant 0 : index
    %12 = vector.load %arg0[%c1_12, %c0_13] : memref<4x16xf32, #tpu.memory_space<vmem>>, vector<1x16xf32>
    %13 = arith.mulf %11, %12 : vector<1x16xf32>
    %14 = arith.addf %10, %13 : vector<1x16xf32>
    %c1_14 = arith.constant 1 : index
    %c0_15 = arith.constant 0 : index
    %15 = vector.load %arg2[%c1_14, %c0_15] : memref<4x16xf32, #tpu.memory_space<vmem>>, vector<1x16xf32>
    tpu.vector_store %arg2[%c1_14, %c0_15], %14 {strides = array<i32>} : memref<4x16xf32, #tpu.memory_space<vmem>>, vector<1x16xf32>,
    %c0_16 = arith.constant 0 : index
    %c0_17 = arith.constant 0 : index
    %16 = vector.load %arg1[%c0_16, %c0_17] : memref<4x16xf32, #tpu.memory_space<vmem>>, vector<1x16xf32>
    %c2_18 = arith.constant 2 : index
    %c0_19 = arith.constant 0 : index
    %17 = vector.load %arg0[%c2_18, %c0_19] : memref<4x16xf32, #tpu.memory_space<vmem>>, vector<1x16xf32>
    %18 = arith.mulf %16, %17 : vector<1x16xf32>
    %c1_20 = arith.constant 1 : index
    %c0_21 = arith.constant 0 : index
    %19 = vector.load %arg1[%c1_20, %c0_21] : memref<4x16xf32, #tpu.memory_space<vmem>>, vector<1x16xf32>
    %c3_22 = arith.constant 3 : index
    %c0_23 = arith.constant 0 : index
    %20 = vector.load %arg0[%c3_22, %c0_23] : memref<4x16xf32, #tpu.memory_space<vmem>>, vector<1x16xf32>
    %21 = arith.mulf %19, %20 : vector<1x16xf32>
    %22 = arith.addf %18, %21 : vector<1x16xf32>
    %c2_24 = arith.constant 2 : index
    %c0_25 = arith.constant 0 : index
    %23 = vector.load %arg2[%c2_24, %c0_25] : memref<4x16xf32, #tpu.memory_space<vmem>>, vector<1x16xf32>
    tpu.vector_store %arg2[%c2_24, %c0_25], %22 {strides = array<i32>} : memref<4x16xf32, #tpu.memory_space<vmem>>, vector<1x16xf32>,
    %c2_26 = arith.constant 2 : index
    %c0_27 = arith.constant 0 : index
    %24 = vector.load %arg1[%c2_26, %c0_27] : memref<4x16xf32, #tpu.memory_space<vmem>>, vector<1x16xf32>
    %c2_28 = arith.constant 2 : index
    %c0_29 = arith.constant 0 : index
    %25 = vector.load %arg0[%c2_28, %c0_29] : memref<4x16xf32, #tpu.memory_space<vmem>>, vector<1x16xf32>
    %26 = arith.mulf %24, %25 : vector<1x16xf32>
    %c3_30 = arith.constant 3 : index
    %c0_31 = arith.constant 0 : index
    %27 = vector.load %arg1[%c3_30, %c0_31] : memref<4x16xf32, #tpu.memory_space<vmem>>, vector<1x16xf32>
    %c3_32 = arith.constant 3 : index
    %c0_33 = arith.constant 0 : index
    %28 = vector.load %arg0[%c3_32, %c0_33] : memref<4x16xf32, #tpu.memory_space<vmem>>, vector<1x16xf32>
    %29 = arith.mulf %27, %28 : vector<1x16xf32>
    %30 = arith.addf %26, %29 : vector<1x16xf32>
    %c3_34 = arith.constant 3 : index
    %c0_35 = arith.constant 0 : index
    %31 = vector.load %arg2[%c3_34, %c0_35] : memref<4x16xf32, #tpu.memory_space<vmem>>, vector<1x16xf32>
    tpu.vector_store %arg2[%c3_34, %c0_35], %30 {strides = array<i32>} : memref<4x16xf32, #tpu.memory_space<vmem>>, vector<1x16xf32>,
    return
  }
}

</mosaic_0001>

<llo_original>
// kernel: tpu_custom_call.1
$region0: #{tpu_custom_call.1}
  #allocation0 [shape = 'u32[]', space=smem, size = 0x4, offset = 0x4, fixed_abs, tag = 'smem constant byte address 0x4 - core index']
  #allocation1 [shape = 'u32[144,128]{1,0:T(1,128)}', space=vmem, size = 0x12000, scoped, tag = 'internal scratch']
  %s0 = inlined_call_operand.hbm [shape: f32[4,16], index: 0, kind: input, shape index: {}]
  %s1 = inlined_call_operand.hbm [shape: f32[4,16], index: 1, kind: input, shape index: {}]
  %s2 = inlined_call_operand.hbm [shape: f32[4,16], index: 2, kind: output, shape index: {}]
  %s3 = sld [smem:[#allocation0]]
  $region26: #{tpu_custom_call.1} parent=0
    _
  %s5 = ssub.s32 1, %s3
  %s6 = scalar_select 0, %s5, %s3
  $region1: #{tpu_custom_call.1} parent=0
    #allocation2 [shape = 'u8[2048]{0}', space=vmem, size = 0x800, scoped, tag = 'input window, operand 0, single buffered']
    #allocation3 [shape = 's32[1]{0}', space=sflag, size = 0x4, scoped, tag = 'scoped memory for tpu_custom_call.1']
    #allocation4 [shape = 's32[1]{0}', space=sflag, size = 0x4, scoped, tag = 'scoped memory for tpu_custom_call.1']
    #allocation5 [shape = 'u8[2048]{0}', space=vmem, size = 0x800, scoped, tag = 'input window, operand 1, single buffered']
    #allocation6 [shape = 's32[1]{0}', space=sflag, size = 0x4, scoped, tag = 'scoped memory for tpu_custom_call.1']
    #allocation7 [shape = 'u8[2048]{0}', space=vmem, size = 0x800, scoped, tag = 'output window, operand 0, single buffered']
    %7 = vsyncpa [#allocation3], 0
    %8 = vsyncpa [#allocation6], 0
    %9 = vsyncpa [#allocation4], 0
    // Predicated region
    $region2: #{tpu_custom_call.1} parent=1 // pred_check
      _
    $region3: #{tpu_custom_call.1} parent=1 // pred_check_branch
      %11 = sbr.rel (0) target = $region5
    $region4: #{tpu_custom_call.1} parent=1 // pred_region
      %s13 = ssub.s32 64, 64
      %14 = vsyncadd [#allocation3], %s13
      %s16 = sshll.u32 [#allocation2], 4
      %s17 = int_to_ptr.vmem [resolvable:$true] %s16
      %19 = dma.hbm_to_vmem [thread:$0]  %s0, 64, %s17, [#allocation3]
    $region5: #{tpu_custom_call.1} parent=1 // pred_fallthru
      _
    // Predicated region
    $region6: #{tpu_custom_call.1} parent=1 // pred_check
      _
    $region7: #{tpu_custom_call.1} parent=1 // pred_check_branch
      %21 = sbr.rel (0) target = $region9
    $region8: #{tpu_custom_call.1} parent=1 // pred_region
      %s23 = ssub.s32 64, 64
      %24 = vsyncadd [#allocation6], %s23
      %s26 = sshll.u32 [#allocation5], 4
      %s27 = int_to_ptr.vmem [resolvable:$true] %s26
      %29 = dma.hbm_to_vmem [thread:$0]  %s1, 64, %s27, [#allocation6]
    $region9: #{tpu_custom_call.1} parent=1 // pred_fallthru
      _
    // Predicated region
    $region10: #{tpu_custom_call.1} parent=1 // pred_check
      _
    $region11: #{tpu_custom_call.1} parent=1 // pred_check_branch
      %31 = sbr.rel (0) target = $region13
    $region12: #{tpu_custom_call.1} parent=1 // pred_region
      %32 = dma.done [#allocation3], 64
    $region13: #{tpu_custom_call.1} parent=1 // pred_fallthru
      _
    // Predicated region
    $region14: #{tpu_custom_call.1} parent=1 // pred_check
      _
    $region15: #{tpu_custom_call.1} parent=1 // pred_check_branch
      %34 = sbr.rel (0) target = $region17
    $region16: #{tpu_custom_call.1} parent=1 // pred_region
      %35 = dma.done [#allocation6], 64
    $region17: #{tpu_custom_call.1} parent=1 // pred_fallthru
      _
    %v36 = vld [vmem:[#allocation5] sm:$0x1]
    %v37 = vld [vmem:[#allocation2] sm:$0x1]
    %v38 = vmul.f32 %v36, %v37
    %v39 = vld [vmem:[#allocation5 + $0x1] sm:$0x1]
    %v40 = vld [vmem:[#allocation2 + $0x1] sm:$0x1]
    %v41 = vmul.f32 %v39, %v40
    %v42 = vadd.f32 %v38, %v41
    %vm43 = vcmask 122880
    %44 = vst.msk [vmem:[#allocation7] sm:$0x1] %vm43, %v42
    %v45 = vld [vmem:[#allocation5 + $0x2] sm:$0x1]
    %v46 = vld [vmem:[#allocation2] sm:$0x1]
    %v47 = vmul.f32 %v45, %v46
    %v48 = vld [vmem:[#allocation5 + $0x3] sm:$0x1]
    %v49 = vld [vmem:[#allocation2 + $0x1] sm:$0x1]
    %v50 = vmul.f32 %v48, %v49
    %v51 = vadd.f32 %v47, %v50
    %52 = vst.msk [vmem:[#allocation7 + $0x1] sm:$0x1] %vm43, %v51
    %v53 = vld [vmem:[#allocation5] sm:$0x1]
    %v54 = vld [vmem:[#allocation2 + $0x2] sm:$0x1]
    %v55 = vmul.f32 %v53, %v54
    %v56 = vld [vmem:[#allocation5 + $0x1] sm:$0x1]
    %v57 = vld [vmem:[#allocation2 + $0x3] sm:$0x1]
    %v58 = vmul.f32 %v56, %v57
    %v59 = vadd.f32 %v55, %v58
    %60 = vst.msk [vmem:[#allocation7 + $0x2] sm:$0x1] %vm43, %v59
    %v61 = vld [vmem:[#allocation5 + $0x2] sm:$0x1]
    %v62 = vld [vmem:[#allocation2 + $0x2] sm:$0x1]
    %v63 = vmul.f32 %v61, %v62
    %v64 = vld [vmem:[#allocation5 + $0x3] sm:$0x1]
    %v65 = vld [vmem:[#allocation2 + $0x3] sm:$0x1]
    %v66 = vmul.f32 %v64, %v65
    %v67 = vadd.f32 %v63, %v66
    %68 = vst.msk [vmem:[#allocation7 + $0x3] sm:$0x1] %vm43, %v67
    // Predicated region
    $region18: #{tpu_custom_call.1} parent=1 // pred_check
      _
    $region19: #{tpu_custom_call.1} parent=1 // pred_check_branch
      %70 = sbr.rel (0) target = $region21
    $region20: #{tpu_custom_call.1} parent=1 // pred_region
      %s72 = ssub.s32 64, 64
      %73 = vsyncadd [#allocation4], %s72
      %s75 = sshll.u32 [#allocation7], 4
      %s76 = int_to_ptr.vmem [resolvable:$true] %s75
      %78 = dma.vmem_to_hbm [thread:$0]  %s76, 64, %s2, [#allocation4]
    $region21: #{tpu_custom_call.1} parent=1 // pred_fallthru
      _
    // Predicated region
    $region22: #{tpu_custom_call.1} parent=1 // pred_check
      _
    $region23: #{tpu_custom_call.1} parent=1 // pred_check_branch
      %80 = sbr.rel (0) target = $region25
    $region24: #{tpu_custom_call.1} parent=1 // pred_region
      %81 = dma.done [#allocation4], 64
    $region25: #{tpu_custom_call.1} parent=1 // pred_fallthru
      _
    %82 = vsyncpa [#allocation3], 1
    %83 = vsyncpa [#allocation6], 1
    %84 = vsyncpa [#allocation4], 1

</llo_original>
